<compile_context>
chip_gen: v6e
topology: v6e:2x2x1
jax: 0.10.0
libtpu: 0.0.40
codegen_flags: <defaults>
</compile_context>

<pallas_src>
import jax
import jax.numpy as jnp
from jax import lax
from jax.experimental import pallas as pl
from jax.experimental.pallas import tpu as pltpu


def _round_up(x, m):
    return ((x + m - 1) // m) * m


def _pick_block_rows():
    """Per-generation default batch tile (rows), sized against scoped-VMEM
    defaults with the ~4x lane padding of the 32-wide x block accounted for:
      v5e (16 MiB scoped default) -> 4096 ; v6e / v7x (32 MiB) -> 8192."""
    try:
        kind = jax.devices()[0].device_kind.lower()
    except Exception:
        kind = ""
    if "v5" in kind:
        return 4096
    return 8192


def fnn_kernel(x_ref, w1_ref, b1_ref, w2_ref, b2_ref, w3_ref, b3t_ref, ot_ref):
    # One (TB, K) batch tile; the whole MLP is fused on VMEM-resident data.
    x = x_ref[...]
    h1 = jnp.dot(x, w1_ref[...], preferred_element_type=jnp.float32) + b1_ref[...]
    h1 = jnp.maximum(h1, 0.0)
    h2 = jnp.dot(h1, w2_ref[...], preferred_element_type=jnp.float32) + b2_ref[...]
    h2 = jnp.maximum(h2, 0.0)
    # Emit the transposed (2, TB) result straight from the MXU: contract w3's
    # input dim (0) with h2's feature dim (1). This keeps the output block
    # lane-dense WITHOUT pushing ~TB/8 vreg transposes through the XLU.
    y_t = lax.dot_general(
        w3_ref[...], h2,
        dimension_numbers=(((0,), (1,)), ((), ())),
        preferred_element_type=jnp.float32,
    ) + b3t_ref[...]                                   # b3t is (2, 1), broadcasts
    ot_ref[...] = y_t.astype(ot_ref.dtype)


def fnn_forward(x, params, *, block_rows=None, transposed_output=False):
    """x: (B, input_size). params: w{1,2,3} as (in, out), b{1,2,3} as (1, out).

    Returns (B, 2) by default (PyTorch layout); (2, B) if transposed_output
    (skips one small XLA transpose pass / HBM round-trip of the result)."""
    B, K = x.shape
    w1, b1, w2, b2, w3, b3 = (params[k] for k in ("w1", "b1", "w2", "b2", "w3", "b3"))
    b3t = b3.reshape(2, 1)   # (1,2) -> (2,1): lets the kernel add the bias to (2, TB)

    if block_rows is None:
        block_rows = _pick_block_rows()
    block_rows = max(128, (block_rows // 128) * 128)

    # Batch tile: as large as the per-generation VMEM budget allows (amortizes
    # the ~0.35 us/step grid overhead), but capped so there are always >= 2
    # grid steps when B permits -- otherwise "parallel" gives v7x's second
    # TensorCore nothing to do.
    tb = max(128, min(block_rows, _round_up(pl.cdiv(B, 2), 128)))
    grid = (pl.cdiv(B, tb),)

    def const_spec(shape):
        # Full-extent block, same tile every grid step -> stays VMEM-resident.
        return pl.BlockSpec(shape, lambda i, _n=len(shape): (0,) * _n)

    # Advisory cost hint: memory-bound custom call (helps XLA overlap
    # neighboring ops); flops = 2*B*(K*16 + 16*4 + 4*2), transcendentals = 0.
    weight_bytes = sum(int(v.size) * v.dtype.itemsize
                       for v in (w1, b1, w2, b2, w3, b3))
    cost = pl.CostEstimate(
        flops=2 * B * (K * 16 + 16 * 4 + 4 * 2),
        bytes_accessed=int(x.size) * x.dtype.itemsize + B * 2 * 4 + weight_bytes,
        transcendentals=0,
    )

    out_t = pl.pallas_call(
        fnn_kernel,
        out_shape=jax.ShapeDtypeStruct((2, B), jnp.float32),
        grid=grid,
        in_specs=[
            # Stream x batch tiles. (If xprof shows exposed x-DMA gaps at large
            # TB, add pipeline_mode=pl.Buffered(3) here -- and only here.)
            pl.BlockSpec((tb, K), lambda i: (i, 0)),
            const_spec(w1.shape), const_spec(b1.shape),
            const_spec(w2.shape), const_spec(b2.shape),
            const_spec(w3.shape), const_spec(b3t.shape),
        ],
        out_specs=pl.BlockSpec((2, tb), lambda i: (0, i)),   # lane-dense (2, TB) blocks
        compiler_params=pltpu.CompilerParams(
            dimension_semantics=("parallel",)),               # batch split over v7x's 2 TCs
        cost_estimate=cost,
    )(x, w1, b1, w2, b2, w3, b3t)

    if transposed_output:
        return out_t          # (2, B)
    return out_t.T            # (B, 2) -- tiny slab, cheap wrapper transpose


def init_params(key, input_size):
    """Deterministic init mimicking PyTorch Linear default (uniform +/- 1/sqrt(fan_in)).
    Weights stored as (in, out); biases as (1, out) so they stay 2-D on TPU."""
    dims = [(input_size, 16), (16, 4), (4, 2)]
    params = {}
    for i, (fan_in, fan_out) in enumerate(dims, start=1):
        key, kw, kb = jax.random.split(key, 3)
        bound = 1.0 / jnp.sqrt(jnp.float32(fan_in))
        params[f"w{i}"] = jax.random.uniform(
            kw, (fan_in, fan_out), jnp.float32, minval=-bound, maxval=bound)
        params[f"b{i}"] = jax.random.uniform(
            kb, (1, fan_out), jnp.float32, minval=-bound, maxval=bound)
    return params


def reference_forward(x, params):
    h1 = jnp.maximum(x @ params["w1"] + params["b1"], 0.0)
    h2 = jnp.maximum(h1 @ params["w2"] + params["b2"], 0.0)
    return h2 @ params["w3"] + params["b3"]


if __name__ == "__main__":
    key = jax.random.PRNGKey(0)
    input_size = 32

    key, kp = jax.random.split(key)
    params = init_params(kp, input_size)

    # Small demo shapes. The >=2-grid-step cap means both cases exercise a
    # multi-step pipelined grid; the second case has a ragged last tile
    # (Pallas clips the writeback to the valid rows).
    for batch in (256, 200):
        key, kx = jax.random.split(key)
        x = jax.random.normal(kx, (batch, input_size), jnp.float32)

        y = fnn_forward(x, params)
        jax.block_until_ready(y)

        y_ref = reference_forward(x, params)
        assert y.shape == (batch, 2)
        assert jnp.allclose(y, y_ref, atol=1e-4, rtol=1e-4), float(
            jnp.max(jnp.abs(y - y_ref)))

    # Also check the transposed-output fast path ((2, B), no wrapper transpose).
    y_t = fnn_forward(x, params, transposed_output=True)
    jax.block_until_ready(y_t)
    assert y_t.shape == (2, x.shape[0])
    assert jnp.allclose(y_t.T, reference_forward(x, params), atol=1e-4, rtol=1e-4)

    print("KERNEL_OK")
</pallas_src>

<mosaic_0001>
module attributes {stable_mosaic.version = 11 : i64} {
  func.func @fnn_kernel(%arg0: i32, %arg1: memref<128x32xf32, #tpu.memory_space<vmem>>, %arg2: memref<32x16xf32, #tpu.memory_space<vmem>>, %arg3: memref<1x16xf32, #tpu.memory_space<vmem>>, %arg4: memref<16x4xf32, #tpu.memory_space<vmem>>, %arg5: memref<1x4xf32, #tpu.memory_space<vmem>>, %arg6: memref<4x2xf32, #tpu.memory_space<vmem>>, %arg7: memref<2x1xf32, #tpu.memory_space<vmem>>, %arg8: memref<2x128xf32, #tpu.memory_space<vmem>>) attributes {dimension_semantics = [#tpu.dimension_semantics<parallel>], iteration_bounds = array<i64: 2>, scalar_prefetch = 0 : i64, scratch_operands = 0 : i64, tpu.core_type = #tpu.core_type<tc>, window_params = [{transform_indices = @transform_0, window_bounds = array<i64: 128, 32>}, {pipeline_mode = #tpu.pipeline_mode<synchronous>, transform_indices = @transform_1, window_bounds = array<i64: 32, 16>}, {pipeline_mode = #tpu.pipeline_mode<synchronous>, transform_indices = @transform_2, window_bounds = array<i64: 1, 16>}, {pipeline_mode = #tpu.pipeline_mode<synchronous>, transform_indices = @transform_3, window_bounds = array<i64: 16, 4>}, {pipeline_mode = #tpu.pipeline_mode<synchronous>, transform_indices = @transform_4, window_bounds = array<i64: 1, 4>}, {pipeline_mode = #tpu.pipeline_mode<synchronous>, transform_indices = @transform_5, window_bounds = array<i64: 4, 2>}, {pipeline_mode = #tpu.pipeline_mode<synchronous>, transform_indices = @transform_6, window_bounds = array<i64: 2, 1>}, {transform_indices = @transform_7, window_bounds = array<i64: 2, 128>}]} {
    %c0 = arith.constant 0 : index
    %c0_0 = arith.constant 0 : index
    %0 = vector.load %arg1[%c0, %c0_0] : memref<128x32xf32, #tpu.memory_space<vmem>>, vector<128x32xf32>
    %c0_1 = arith.constant 0 : index
    %c0_2 = arith.constant 0 : index
    %1 = vector.load %arg2[%c0_1, %c0_2] : memref<32x16xf32, #tpu.memory_space<vmem>>, vector<32x16xf32>
    %cst = arith.constant dense<0.000000e+00> : vector<128x16xf32>
    %2 = tpu.matmul %0, %1, %cst {dimension_numbers = #tpu.dot_dimension_numbers<[1], [0], [0], [1], [0, 0, 1, 1], [], []>} : vector<128x32xf32>, vector<32x16xf32>, vector<128x16xf32> -> vector<128x16xf32>
    %c0_3 = arith.constant 0 : index
    %c0_4 = arith.constant 0 : index
    %3 = vector.load %arg3[%c0_3, %c0_4] : memref<1x16xf32, #tpu.memory_space<vmem>>, vector<1x16xf32>
    %4 = vector.broadcast %3 : vector<1x16xf32> to vector<128x16xf32>
    %5 = arith.addf %2, %4 : vector<128x16xf32>
    %cst_5 = arith.constant 0.000000e+00 : f32
    %6 = vector.broadcast %cst_5 : f32 to vector<128x16xf32>
    %7 = arith.maximumf %5, %6 : vector<128x16xf32>
    %c0_6 = arith.constant 0 : index
    %c0_7 = arith.constant 0 : index
    %8 = vector.load %arg4[%c0_6, %c0_7] : memref<16x4xf32, #tpu.memory_space<vmem>>, vector<16x4xf32>
    %cst_8 = arith.constant dense<0.000000e+00> : vector<128x4xf32>
    %9 = tpu.matmul %7, %8, %cst_8 {dimension_numbers = #tpu.dot_dimension_numbers<[1], [0], [0], [1], [0, 0, 1, 1], [], []>} : vector<128x16xf32>, vector<16x4xf32>, vector<128x4xf32> -> vector<128x4xf32>
    %c0_9 = arith.constant 0 : index
    %c0_10 = arith.constant 0 : index
    %10 = vector.load %arg5[%c0_9, %c0_10] : memref<1x4xf32, #tpu.memory_space<vmem>>, vector<1x4xf32>
    %11 = vector.broadcast %10 : vector<1x4xf32> to vector<128x4xf32>
    %12 = arith.addf %9, %11 : vector<128x4xf32>
    %cst_11 = arith.constant 0.000000e+00 : f32
    %13 = vector.broadcast %cst_11 : f32 to vector<128x4xf32>
    %14 = arith.maximumf %12, %13 : vector<128x4xf32>
    %c0_12 = arith.constant 0 : index
    %c0_13 = arith.constant 0 : index
    %15 = vector.load %arg6[%c0_12, %c0_13] : memref<4x2xf32, #tpu.memory_space<vmem>>, vector<4x2xf32>
    %cst_14 = arith.constant dense<0.000000e+00> : vector<2x128xf32>
    %16 = tpu.matmul %15, %14, %cst_14 {dimension_numbers = #tpu.dot_dimension_numbers<[0], [1], [1], [0], [0, 1, 1, 0], [], []>} : vector<4x2xf32>, vector<128x4xf32>, vector<2x128xf32> -> vector<2x128xf32>
    %c0_15 = arith.constant 0 : index
    %c0_16 = arith.constant 0 : index
    %17 = vector.load %arg7[%c0_15, %c0_16] : memref<2x1xf32, #tpu.memory_space<vmem>>, vector<2x1xf32>
    %18 = vector.broadcast %17 : vector<2x1xf32> to vector<2x128xf32>
    %19 = arith.addf %16, %18 : vector<2x128xf32>
    %c0_17 = arith.constant 0 : index
    %c0_18 = arith.constant 0 : index
    %20 = vector.load %arg8[%c0_17, %c0_18] : memref<2x128xf32, #tpu.memory_space<vmem>>, vector<2x128xf32>
    tpu.vector_store %arg8[%c0_17, %c0_18], %19 {strides = array<i32>} : memref<2x128xf32, #tpu.memory_space<vmem>>, vector<2x128xf32>,
    return
  }
  func.func @transform_0(%arg0: i32) -> (i32, i32) {
    %c0_i32 = arith.constant 0 : i32
    %c0_i32_0 = arith.constant 0 : i32
    return %arg0, %c0_i32 : i32, i32
  }
  func.func @transform_1(%arg0: i32) -> (i32, i32) {
    %c0_i32 = arith.constant 0 : i32
    %c0_i32_0 = arith.constant 0 : i32
    %c0_i32_1 = arith.constant 0 : i32
    return %c0_i32, %c0_i32_0 : i32, i32
  }
  func.func @transform_2(%arg0: i32) -> (i32, i32) {
    %c0_i32 = arith.constant 0 : i32
    %c0_i32_0 = arith.constant 0 : i32
    %c0_i32_1 = arith.constant 0 : i32
    return %c0_i32, %c0_i32_0 : i32, i32
  }
  func.func @transform_3(%arg0: i32) -> (i32, i32) {
    %c0_i32 = arith.constant 0 : i32
    %c0_i32_0 = arith.constant 0 : i32
    %c0_i32_1 = arith.constant 0 : i32
    return %c0_i32, %c0_i32_0 : i32, i32
  }
  func.func @transform_4(%arg0: i32) -> (i32, i32) {
    %c0_i32 = arith.constant 0 : i32
    %c0_i32_0 = arith.constant 0 : i32
    %c0_i32_1 = arith.constant 0 : i32
    return %c0_i32, %c0_i32_0 : i32, i32
  }
  func.func @transform_5(%arg0: i32) -> (i32, i32) {
    %c0_i32 = arith.constant 0 : i32
    %c0_i32_0 = arith.constant 0 : i32
    %c0_i32_1 = arith.constant 0 : i32
    return %c0_i32, %c0_i32_0 : i32, i32
  }
  func.func @transform_6(%arg0: i32) -> (i32, i32) {
    %c0_i32 = arith.constant 0 : i32
    %c0_i32_0 = arith.constant 0 : i32
    %c0_i32_1 = arith.constant 0 : i32
    return %c0_i32, %c0_i32_0 : i32, i32
  }
  func.func @transform_7(%arg0: i32) -> (i32, i32) {
    %c0_i32 = arith.constant 0 : i32
    %c0_i32_0 = arith.constant 0 : i32
    return %c0_i32, %arg0 : i32, i32
  }
}

</mosaic_0001>

<llo_original>
// kernel: tpu_custom_call.1
$region0: #{tpu_custom_call.1}
  #allocation0 [shape = 'u32[]', space=smem, size = 0x4, offset = 0x4, fixed_abs, tag = 'smem constant byte address 0x4 - core index']
  #allocation1 [shape = 'u32[144,128]{1,0:T(1,128)}', space=vmem, size = 0x12000, scoped, tag = 'internal scratch']
  %s0 = inlined_call_operand.vmem [shape: f32[256,32], index: 0, kind: input, shape index: {}]
  %s1 = inlined_call_operand.vmem [shape: f32[32,16], index: 1, kind: input, shape index: {}]
  %s2 = inlined_call_operand.vmem [shape: f32[1,16], index: 2, kind: input, shape index: {}]
  %s3 = inlined_call_operand.vmem [shape: f32[16,4], index: 3, kind: input, shape index: {}]
  %s4 = inlined_call_operand.vmem [shape: f32[1,4], index: 4, kind: input, shape index: {}]
  %s5 = inlined_call_operand.vmem [shape: f32[4,2], index: 5, kind: input, shape index: {}]
  %s6 = inlined_call_operand.vmem [shape: f32[2,1], index: 6, kind: input, shape index: {}]
  %s7 = inlined_call_operand.hbm [shape: f32[2,256], index: 7, kind: output, shape index: {}]
  %s8 = sld [smem:[#allocation0]]
  $region61: #{tpu_custom_call.1} parent=0
    _
  %s10 = ssub.s32 1, %s8
  %s11 = scalar_select 0, %s10, %s8
  $region1: #{tpu_custom_call.1} parent=0
    #allocation2 [shape = 'u8[2048]{0}', space=vmem, size = 0x800, scoped, tag = 'output window, operand 0']
    #allocation3 [shape = 's32[2]{0}', space=sflag, size = 0x8, scoped, tag = 'scoped memory for tpu_custom_call.1']
    %12 = vsyncpa [#allocation3], 0
    %s13 = scalar_lea.sflag [#allocation3], 1
    %14 = vsyncpa %s13, 0
    loop: start=0, step=1, limit=4
    $region2: #{tpu_custom_call.1} parent=1 // loop_pre_header
      _
    $region3: #{tpu_custom_call.1} parent=1 // loop_header
      %s16 = sphi 0, %s20
      %p17 = scmp.ge.s32.totalorder %s16, 4
      %s26 = sphi 0, %s28
      %s29 = sphi 0, %s26
      %s30 = sphi 0, %s29
      %s46 = sphi 0, %s30
      %s50 = sphi 0, %s50
      %s52 = sphi 0, %s50
      %s53 = sphi 0, %s52
      %s67 = sphi 0, %s53
      %s71 = sphi 0, %s71
      %s73 = sphi 0, %s71
      %s74 = sphi 0, %s73
      %s88 = sphi 0, %s74
      %s92 = sphi 0, %s92
      %s94 = sphi 0, %s92
      %s95 = sphi 0, %s94
      %s109 = sphi 0, %s95
      %s113 = sphi 0, %s113
      %s115 = sphi 0, %s113
      %s116 = sphi 0, %s115
      %s130 = sphi 0, %s116
      %s134 = sphi 0, %s134
      %s136 = sphi 0, %s134
      %s137 = sphi 0, %s136
      %s151 = sphi 0, %s137
      %s155 = sphi 0, %s155
      %s157 = sphi 0, %s155
      %s158 = sphi 0, %s157
      %s172 = sphi 0, %s158
      %s178 = sphi 0, %s180
      %s181 = sphi 0, %s178
      %s182 = sphi 0, %s181
      %s198 = sphi 0, %s182
    $region4: #{tpu_custom_call.1} parent=1 // loop_header_branch
      %19 = sbr.rel (%p17) target = $region8
    $region5: #{tpu_custom_call.1} parent=1 // loop_body
      %s21 = ssub.s32 %s16, 1
      %s22 = ssub.s32 %s16, 2
      %s23 = sadd.s32 %s16, 1
      %s24 = ssub.s32 %s16, %s23
      %p25 = scmp.eq.s32.totalorder %s24, 0
      %s27 = sadd.s32 %s26, 1
      %s28 = scalar_select %p25, %s26, %s27
      %p31 = pneg %p25
      %p32 = scmp.eq.s32.totalorder %s16, 1
      %p33 = por %p31, %p32
      %p34 = scmp.ne.s32.totalorder %s26, %s29
      %p35 = scmp.eq.s32.totalorder %s16, 0
      %p36 = por %p34, %p35
      %p37 = scmp.ne.s32.totalorder %s26, %s29
      %p38 = scmp.eq.s32.totalorder %s21, 1
      %p39 = por %p37, %p38
      %p40 = scmp.ne.s32.totalorder %s29, %s30
      %p41 = scmp.eq.s32.totalorder %s21, 0
      %p42 = por %p40, %p41
      %p43 = scmp.ne.s32.totalorder %s29, %s30
      %p44 = scmp.eq.s32.totalorder %s22, 1
      %p45 = por %p43, %p44
      %p47 = scmp.ne.s32.totalorder %s30, %s46
      %p48 = scmp.eq.s32.totalorder %s22, 0
      %p49 = por %p47, %p48
      %s51 = sadd.s32 %s50, 1
      %p54 = scmp.eq.s32.totalorder %s16, 1
      %p55 = scmp.ne.s32.totalorder %s50, %s52
      %p56 = scmp.eq.s32.totalorder %s16, 0
      %p57 = por %p55, %p56
      %p58 = scmp.ne.s32.totalorder %s50, %s52
      %p59 = scmp.eq.s32.totalorder %s21, 1
      %p60 = por %p58, %p59
      %p61 = scmp.ne.s32.totalorder %s52, %s53
      %p62 = scmp.eq.s32.totalorder %s21, 0
      %p63 = por %p61, %p62
      %p64 = scmp.ne.s32.totalorder %s52, %s53
      %p65 = scmp.eq.s32.totalorder %s22, 1
      %p66 = por %p64, %p65
      %p68 = scmp.ne.s32.totalorder %s53, %s67
      %p69 = scmp.eq.s32.totalorder %s22, 0
      %p70 = por %p68, %p69
      %s72 = sadd.s32 %s71, 1
      %p75 = scmp.eq.s32.totalorder %s16, 1
      %p76 = scmp.ne.s32.totalorder %s71, %s73
      %p77 = scmp.eq.s32.totalorder %s16, 0
      %p78 = por %p76, %p77
      %p79 = scmp.ne.s32.totalorder %s71, %s73
      %p80 = scmp.eq.s32.totalorder %s21, 1
      %p81 = por %p79, %p80
      %p82 = scmp.ne.s32.totalorder %s73, %s74
      %p83 = scmp.eq.s32.totalorder %s21, 0
      %p84 = por %p82, %p83
      %p85 = scmp.ne.s32.totalorder %s73, %s74
      %p86 = scmp.eq.s32.totalorder %s22, 1
      %p87 = por %p85, %p86
      %p89 = scmp.ne.s32.totalorder %s74, %s88
      %p90 = scmp.eq.s32.totalorder %s22, 0
      %p91 = por %p89, %p90
      %s93 = sadd.s32 %s92, 1
      %p96 = scmp.eq.s32.totalorder %s16, 1
      %p97 = scmp.ne.s32.totalorder %s92, %s94
      %p98 = scmp.eq.s32.totalorder %s16, 0
      %p99 = por %p97, %p98
      %p100 = scmp.ne.s32.totalorder %s92, %s94
      %p101 = scmp.eq.s32.totalorder %s21, 1
      %p102 = por %p100, %p101
      %p103 = scmp.ne.s32.totalorder %s94, %s95
      %p104 = scmp.eq.s32.totalorder %s21, 0
      %p105 = por %p103, %p104
      %p106 = scmp.ne.s32.totalorder %s94, %s95
      %p107 = scmp.eq.s32.totalorder %s22, 1
      %p108 = por %p106, %p107
      %p110 = scmp.ne.s32.totalorder %s95, %s109
      %p111 = scmp.eq.s32.totalorder %s22, 0
      %p112 = por %p110, %p111
      %s114 = sadd.s32 %s113, 1
      %p117 = scmp.eq.s32.totalorder %s16, 1
      %p118 = scmp.ne.s32.totalorder %s113, %s115
      %p119 = scmp.eq.s32.totalorder %s16, 0
      %p120 = por %p118, %p119
      %p121 = scmp.ne.s32.totalorder %s113, %s115
      %p122 = scmp.eq.s32.totalorder %s21, 1
      %p123 = por %p121, %p122
      %p124 = scmp.ne.s32.totalorder %s115, %s116
      %p125 = scmp.eq.s32.totalorder %s21, 0
      %p126 = por %p124, %p125
      %p127 = scmp.ne.s32.totalorder %s115, %s116
      %p128 = scmp.eq.s32.totalorder %s22, 1
      %p129 = por %p127, %p128
      %p131 = scmp.ne.s32.totalorder %s116, %s130
      %p132 = scmp.eq.s32.totalorder %s22, 0
      %p133 = por %p131, %p132
      %s135 = sadd.s32 %s134, 1
      %p138 = scmp.eq.s32.totalorder %s16, 1
      %p139 = scmp.ne.s32.totalorder %s134, %s136
      %p140 = scmp.eq.s32.totalorder %s16, 0
      %p141 = por %p139, %p140
      %p142 = scmp.ne.s32.totalorder %s134, %s136
      %p143 = scmp.eq.s32.totalorder %s21, 1
      %p144 = por %p142, %p143
      %p145 = scmp.ne.s32.totalorder %s136, %s137
      %p146 = scmp.eq.s32.totalorder %s21, 0
      %p147 = por %p145, %p146
      %p148 = scmp.ne.s32.totalorder %s136, %s137
      %p149 = scmp.eq.s32.totalorder %s22, 1
      %p150 = por %p148, %p149
      %p152 = scmp.ne.s32.totalorder %s137, %s151
      %p153 = scmp.eq.s32.totalorder %s22, 0
      %p154 = por %p152, %p153
      %s156 = sadd.s32 %s155, 1
      %p159 = scmp.eq.s32.totalorder %s16, 1
      %p160 = scmp.ne.s32.totalorder %s155, %s157
      %p161 = scmp.eq.s32.totalorder %s16, 0
      %p162 = por %p160, %p161
      %p163 = scmp.ne.s32.totalorder %s155, %s157
      %p164 = scmp.eq.s32.totalorder %s21, 1
      %p165 = por %p163, %p164
      %p166 = scmp.ne.s32.totalorder %s157, %s158
      %p167 = scmp.eq.s32.totalorder %s21, 0
      %p168 = por %p166, %p167
      %p169 = scmp.ne.s32.totalorder %s157, %s158
      %p170 = scmp.eq.s32.totalorder %s22, 1
      %p171 = por %p169, %p170
      %p173 = scmp.ne.s32.totalorder %s158, %s172
      %p174 = scmp.eq.s32.totalorder %s22, 0
      %p175 = por %p173, %p174
      %s176 = ssub.s32 %s16, %s23
      %p177 = scmp.eq.s32.totalorder %s176, 0
      %s179 = sadd.s32 %s178, 1
      %s180 = scalar_select %p177, %s178, %s179
      %p183 = pneg %p177
      %p184 = scmp.eq.s32.totalorder %s16, 1
      %p185 = por %p183, %p184
      %p186 = scmp.ne.s32.totalorder %s178, %s181
      %p187 = scmp.eq.s32.totalorder %s16, 0
      %p188 = por %p186, %p187
      %p189 = scmp.ne.s32.totalorder %s178, %s181
      %p190 = scmp.eq.s32.totalorder %s21, 1
      %p191 = por %p189, %p190
      %p192 = scmp.ne.s32.totalorder %s181, %s182
      %p193 = scmp.eq.s32.totalorder %s21, 0
      %p194 = por %p192, %p193
      %p195 = scmp.ne.s32.totalorder %s181, %s182
      %p196 = scmp.eq.s32.totalorder %s22, 1
      %p197 = por %p195, %p196
      %p199 = scmp.ne.s32.totalorder %s182, %s198
      %p200 = scmp.eq.s32.totalorder %s22, 0
      %p201 = por %p199, %p200
      %p202 = scmp.le.s32.totalorder 1, %s16
      %p203 = scmp.lt.s32.totalorder %s16, 3
      %p204 = pnand %p202, %p203
      %p205 = pneg %p204
      // Predicated region
      $region9: #{tpu_custom_call.1} parent=5 // pred_check
        _
      $region10: #{tpu_custom_call.1} parent=5 // pred_check_branch
        %207 = sbr.rel (%p204) target = $region12
      $region11: #{tpu_custom_call.1} parent=5 // pred_region
        %s208 = ssub.s32 %s16, 1
        // Predicated region
        $region13: #{tpu_custom_call.1} parent=11 // pred_check
          %p209 = pneg %p63
        $region14: #{tpu_custom_call.1} parent=11 // pred_check_branch
          %211 = sbr.rel (%p209) target = $region16
        $region15: #{tpu_custom_call.1} parent=11 // pred_region
          _
        $region16: #{tpu_custom_call.1} parent=11 // pred_fallthru
          _
        // Predicated region
        $region17: #{tpu_custom_call.1} parent=11 // pred_check
          %p212 = pneg %p84
        $region18: #{tpu_custom_call.1} parent=11 // pred_check_branch
          %214 = sbr.rel (%p212) target = $region20
        $region19: #{tpu_custom_call.1} parent=11 // pred_region
          _
        $region20: #{tpu_custom_call.1} parent=11 // pred_fallthru
          _
        // Predicated region
        $region21: #{tpu_custom_call.1} parent=11 // pred_check
          %p215 = pneg %p105
        $region22: #{tpu_custom_call.1} parent=11 // pred_check_branch
          %217 = sbr.rel (%p215) target = $region24
        $region23: #{tpu_custom_call.1} parent=11 // pred_region
          _
        $region24: #{tpu_custom_call.1} parent=11 // pred_fallthru
          _
        // Predicated region
        $region25: #{tpu_custom_call.1} parent=11 // pred_check
          %p218 = pneg %p126
        $region26: #{tpu_custom_call.1} parent=11 // pred_check_branch
          %220 = sbr.rel (%p218) target = $region28
        $region27: #{tpu_custom_call.1} parent=11 // pred_region
          _
        $region28: #{tpu_custom_call.1} parent=11 // pred_fallthru
          _
        // Predicated region
        $region29: #{tpu_custom_call.1} parent=11 // pred_check
          %p221 = pneg %p147
        $region30: #{tpu_custom_call.1} parent=11 // pred_check_branch
          %223 = sbr.rel (%p221) target = $region32
        $region31: #{tpu_custom_call.1} parent=11 // pred_region
          _
        $region32: #{tpu_custom_call.1} parent=11 // pred_fallthru
          _
        // Predicated region
        $region33: #{tpu_custom_call.1} parent=11 // pred_check
          %p224 = pneg %p168
        $region34: #{tpu_custom_call.1} parent=11 // pred_check_branch
          %226 = sbr.rel (%p224) target = $region36
        $region35: #{tpu_custom_call.1} parent=11 // pred_region
          _
        $region36: #{tpu_custom_call.1} parent=11 // pred_fallthru
          _
      $region12: #{tpu_custom_call.1} parent=5 // pred_fallthru
        _
      %p227 = scmp.lt.s32.totalorder %s16, 2
      // Predicated region
      $region37: #{tpu_custom_call.1} parent=5 // pred_check
        %p228 = pneg %p227
      $region38: #{tpu_custom_call.1} parent=5 // pred_check_branch
        %230 = sbr.rel (%p228) target = $region40
      $region39: #{tpu_custom_call.1} parent=5 // pred_region
        // Predicated region
        $region41: #{tpu_custom_call.1} parent=39 // pred_check
          %p231 = pneg %p36
        $region42: #{tpu_custom_call.1} parent=39 // pred_check_branch
          %233 = sbr.rel (%p231) target = $region44
        $region43: #{tpu_custom_call.1} parent=39 // pred_region
          %s234 = smul.u32 16, %s16
          %p235 = scmp.lt.s32.totalorder %s234, 31
          %s236 = scalar_select %p235, %s234, 31
          %s237 = smul.addr %s236, 8
          %s238 = scalar_lea.vmem %s0, %s237
          %s239 = smul.u32 16, %s16
        $region44: #{tpu_custom_call.1} parent=39 // pred_fallthru
          _
      $region40: #{tpu_custom_call.1} parent=5 // pred_fallthru
        _
      %p240 = scmp.le.s32.totalorder 1, %s16
      %p241 = scmp.lt.s32.totalorder %s16, 3
      %p242 = pnand %p240, %p241
      %p243 = pneg %p242
      // Predicated region
      $region45: #{tpu_custom_call.1} parent=5 // pred_check
        _
      $region46: #{tpu_custom_call.1} parent=5 // pred_check_branch
        %245 = sbr.rel (%p242) target = $region48
      $region47: #{tpu_custom_call.1} parent=5 // pred_region
        %s246 = ssub.s32 %s16, 1
        %s247 = smul.u32 16, %s21
        %p248 = scmp.lt.s32.totalorder %s247, 31
        %s249 = scalar_select %p248, %s247, 31
        %s250 = smul.addr %s249, 8
        %s251 = scalar_lea.vmem %s0, %s250
        %p252 = pneg %p42
        %p253 = pneg %p39
        %p254 = pneg %p63
        %p255 = pneg %p60
        %p256 = pneg %p84
        %p257 = pneg %p81
        %p258 = pneg %p105
        %p259 = pneg %p102
        %p260 = pneg %p126
        %p261 = pneg %p123
        %p262 = pneg %p147
        %p263 = pneg %p144
        %p264 = pneg %p168
        %p265 = pneg %p165
        %p266 = pneg %p194
        %p267 = pneg %p191
        %s268 = sand.u32 %s181, 1
        %s269 = scalar_lea.sflag [#allocation3], %s268
        %s270 = sand.u32 %s181, 1
        %s271 = smul.addr %s270, 2
        %s272 = scalar_lea.vmem [#allocation2], %s271
        %s273 = smul.u32 16, %s21
        %p274 = scmp.lt.s32.totalorder %s273, 31
        %s275 = scalar_select %p274, %s273, 31
        %s276 = smul.addr %s275, 8
        %s277 = scalar_lea.vmem %s0, %s276
        %s278 = smul.u32 16, %s21
        %v279 = vld [vmem:[%s277] sm:$0xff]
        %v280 = vld [vmem:[%s277 + $0x8] sm:$0xff]
        %v281 = vld [vmem:[%s277 + $0x10] sm:$0xff]
        %v282 = vld [vmem:[%s277 + $0x18] sm:$0xff]
        %v283 = vld [vmem:[%s277 + $0x20] sm:$0xff]
        %v284 = vld [vmem:[%s277 + $0x28] sm:$0xff]
        %v285 = vld [vmem:[%s277 + $0x30] sm:$0xff]
        %v286 = vld [vmem:[%s277 + $0x38] sm:$0xff]
        %v287 = vld [vmem:[%s277 + $0x40] sm:$0xff]
        %v288 = vld [vmem:[%s277 + $0x48] sm:$0xff]
        %v289 = vld [vmem:[%s277 + $0x50] sm:$0xff]
        %v290 = vld [vmem:[%s277 + $0x58] sm:$0xff]
        %v291 = vld [vmem:[%s277 + $0x60] sm:$0xff]
        %v292 = vld [vmem:[%s277 + $0x68] sm:$0xff]
        %v293 = vld [vmem:[%s277 + $0x70] sm:$0xff]
        %v294 = vld [vmem:[%s277 + $0x78] sm:$0xff]
        %v295 = vld [vmem:[%s1] sm:$0xff]
        %v296 = vld [vmem:[%s1 + $0x8] sm:$0xff]
        %v297 = vld [vmem:[%s1 + $0x10] sm:$0xff]
        %v298 = vld [vmem:[%s1 + $0x18] sm:$0xff]
        %v299 = vld [vmem:[%s2] sm:$0x1]
        %v301 = vlaneseq
        %v302 = vshrl.u32 %v301, 7
        %v303 = vsub.s32 0, %v302
        %v304 = vrot.slane %v299, %v303
        %vm306 = vcmask 261120
        %v308 = vsel %vm306, %v279, 0
        %v311 = vsel %vm306, %v280, 0
        %v314 = vsel %vm306, %v281, 0
        %v317 = vsel %vm306, %v282, 0
        %v320 = vsel %vm306, %v283, 0
        %v323 = vsel %vm306, %v284, 0
        %v326 = vsel %vm306, %v285, 0
        %v329 = vsel %vm306, %v286, 0
        %v332 = vsel %vm306, %v287, 0
        %v335 = vsel %vm306, %v288, 0
        %v338 = vsel %vm306, %v289, 0
        %v341 = vsel %vm306, %v290, 0
        %v344 = vsel %vm306, %v291, 0
        %v347 = vsel %vm306, %v292, 0
        %v350 = vsel %vm306, %v293, 0
        %v353 = vsel %vm306, %v294, 0
        %355 = vmatprep.subr.mxu0 0.0
        %356 = vmatpush1.msra.mxu0 0.0
        %357 = vmatprep.subr.mxu0 0.0
        %358 = vmatpush1.msra.mxu0 0.0
        %359 = vmatprep.subr.mxu0 0.0
        %360 = vmatpush1.msra.mxu0 0.0
        %361 = vmatprep.subr.mxu0 0.0
        %362 = vmatpush1.msra.mxu0 0.0
        %363 = vmatprep.subr.mxu0 0.0
        %364 = vmatpush1.msra.mxu0 0.0
        %365 = vmatprep.subr.mxu0 0.0
        %366 = vmatpush1.msra.mxu0 0.0
        %367 = vmatprep.subr.mxu0 0.0
        %368 = vmatpush1.msra.mxu0 0.0
        %369 = vmatprep.subr.mxu0 0.0
        %370 = vmatpush1.msra.mxu0 0.0
        %371 = vmatprep.subr.mxu0 0.0
        %372 = vmatpush1.msra.mxu0 0.0
        %373 = vmatprep.subr.mxu0 0.0
        %374 = vmatpush1.msra.mxu0 0.0
        %375 = vmatprep.subr.mxu0 0.0
        %376 = vmatpush1.msra.mxu0 0.0
        %377 = vmatprep.subr.mxu0 0.0
        %378 = vmatpush1.msra.mxu0 0.0
        %379 = vmatprep.subr.mxu0 0.0
        %380 = vmatpush1.msra.mxu0 %v298
        %381 = vmatprep.subr.mxu0 0.0
        %382 = vmatpush1.msra.mxu0 %v297
        %383 = vmatprep.subr.mxu0 0.0
        %384 = vmatpush1.msra.mxu0 %v296
        %385 = vmatprep.subr.mxu0 0.0
        %386 = vmatpush1.msra.mxu0 %v295
        %387 = vmatprep.subr.mxu0 0.0
        %388 = vmatpush2.msra.mxu0 0.0
        %389 = vmatprep.subr.mxu0 0.0
        %390 = vmatpush2.msra.mxu0 0.0
        %391 = vmatprep.subr.mxu0 0.0
        %392 = vmatpush2.msra.mxu0 0.0
        %393 = vmatprep.subr.mxu0 0.0
        %394 = vmatpush2.msra.mxu0 0.0
        %395 = vmatprep.subr.mxu0 0.0
        %396 = vmatpush2.msra.mxu0 0.0
        %397 = vmatprep.subr.mxu0 0.0
        %398 = vmatpush2.msra.mxu0 0.0
        %399 = vmatprep.subr.mxu0 0.0
        %400 = vmatpush2.msra.mxu0 0.0
        %401 = vmatprep.subr.mxu0 0.0
        %402 = vmatpush2.msra.mxu0 0.0
        %403 = vmatprep.subr.mxu0 0.0
        %404 = vmatpush2.msra.mxu0 0.0
        %405 = vmatprep.subr.mxu0 0.0
        %406 = vmatpush2.msra.mxu0 0.0
        %407 = vmatprep.subr.mxu0 0.0
        %408 = vmatpush2.msra.mxu0 0.0
        %409 = vmatprep.subr.mxu0 0.0
        %410 = vmatpush2.msra.mxu0 0.0
        %411 = vmatprep.subr.mxu0 0.0
        %412 = vmatpush2.msra.mxu0 0.0
        %413 = vmatprep.subr.mxu0 0.0
        %414 = vmatpush2.msra.mxu0 0.0
        %415 = vmatprep.subr.mxu0 0.0
        %416 = vmatpush2.msra.mxu0 0.0
        %417 = vmatprep.subr.mxu0 0.0
        %418 = vmatpush2.msra.mxu0 0.0
        %419 = vmatprep.mubr.f32.mxu0 0.0
        %420 = vmatmul.mubr.f32.gmra.mxu0 %v308
        %v421 = vpop.f32.mrf.mxu0
        %v422 = vadd.f32 %v304, %v421
        %v423 = vpop.f32.mrf.mxu0
        %424 = vmatprep.mubr.f32.mxu0 0.0
        %425 = vmatmul.mubr.f32.gmra.mxu0 %v311
        %v426 = vpop.f32.mrf.mxu0
        %v427 = vadd.f32 %v304, %v426
        %v428 = vpop.f32.mrf.mxu0
        %429 = vmatprep.mubr.f32.mxu0 0.0
        %430 = vmatmul.mubr.f32.gmra.mxu0 %v314
        %v431 = vpop.f32.mrf.mxu0
        %v432 = vadd.f32 %v304, %v431
        %v433 = vpop.f32.mrf.mxu0
        %434 = vmatprep.mubr.f32.mxu0 0.0
        %435 = vmatmul.mubr.f32.gmra.mxu0 %v317
        %v436 = vpop.f32.mrf.mxu0
        %v437 = vadd.f32 %v304, %v436
        %v438 = vpop.f32.mrf.mxu0
        %439 = vmatprep.mubr.f32.mxu0 0.0
        %440 = vmatmul.mubr.f32.gmra.mxu0 %v320
        %v441 = vpop.f32.mrf.mxu0
        %v442 = vadd.f32 %v304, %v441
        %v443 = vpop.f32.mrf.mxu0
        %444 = vmatprep.mubr.f32.mxu0 0.0
        %445 = vmatmul.mubr.f32.gmra.mxu0 %v323
        %v446 = vpop.f32.mrf.mxu0
        %v447 = vadd.f32 %v304, %v446
        %v448 = vpop.f32.mrf.mxu0
        %449 = vmatprep.mubr.f32.mxu0 0.0
        %450 = vmatmul.mubr.f32.gmra.mxu0 %v326
        %v451 = vpop.f32.mrf.mxu0
        %v452 = vadd.f32 %v304, %v451
        %v453 = vpop.f32.mrf.mxu0
        %454 = vmatprep.mubr.f32.mxu0 0.0
        %455 = vmatmul.mubr.f32.gmra.mxu0 %v329
        %v456 = vpop.f32.mrf.mxu0
        %v457 = vadd.f32 %v304, %v456
        %v458 = vpop.f32.mrf.mxu0
        %459 = vmatprep.mubr.f32.mxu0 0.0
        %460 = vmatmul.mubr.f32.gmra.mxu0 %v332
        %v461 = vpop.f32.mrf.mxu0
        %v462 = vadd.f32 %v304, %v461
        %v463 = vpop.f32.mrf.mxu0
        %464 = vmatprep.mubr.f32.mxu0 0.0
        %465 = vmatmul.mubr.f32.gmra.mxu0 %v335
        %v466 = vpop.f32.mrf.mxu0
        %v467 = vadd.f32 %v304, %v466
        %v468 = vpop.f32.mrf.mxu0
        %469 = vmatprep.mubr.f32.mxu0 0.0
        %470 = vmatmul.mubr.f32.gmra.mxu0 %v338
        %v471 = vpop.f32.mrf.mxu0
        %v472 = vadd.f32 %v304, %v471
        %v473 = vpop.f32.mrf.mxu0
        %474 = vmatprep.mubr.f32.mxu0 0.0
        %475 = vmatmul.mubr.f32.gmra.mxu0 %v341
        %v476 = vpop.f32.mrf.mxu0
        %v477 = vadd.f32 %v304, %v476
        %v478 = vpop.f32.mrf.mxu0
        %479 = vmatprep.mubr.f32.mxu0 0.0
        %480 = vmatmul.mubr.f32.gmra.mxu0 %v344
        %v481 = vpop.f32.mrf.mxu0
        %v482 = vadd.f32 %v304, %v481
        %v483 = vpop.f32.mrf.mxu0
        %484 = vmatprep.mubr.f32.mxu0 0.0
        %485 = vmatmul.mubr.f32.gmra.mxu0 %v347
        %v486 = vpop.f32.mrf.mxu0
        %v487 = vadd.f32 %v304, %v486
        %v488 = vpop.f32.mrf.mxu0
        %489 = vmatprep.mubr.f32.mxu0 0.0
        %490 = vmatmul.mubr.f32.gmra.mxu0 %v350
        %v491 = vpop.f32.mrf.mxu0
        %v492 = vadd.f32 %v304, %v491
        %v493 = vpop.f32.mrf.mxu0
        %494 = vmatprep.mubr.f32.mxu0 0.0
        %495 = vmatmul.mubr.f32.gmra.mxu0 %v353
        %v496 = vpop.f32.mrf.mxu0
        %v497 = vadd.f32 %v304, %v496
        %v498 = vpop.f32.mrf.mxu0
        %499 = vdwg.mxu0
        %v500 = vmax.f32 %v422, 0.0
        %v501 = vmax.f32 %v427, 0.0
        %v502 = vmax.f32 %v432, 0.0
        %v503 = vmax.f32 %v437, 0.0
        %v504 = vmax.f32 %v442, 0.0
        %v505 = vmax.f32 %v447, 0.0
        %v506 = vmax.f32 %v452, 0.0
        %v507 = vmax.f32 %v457, 0.0
        %v508 = vmax.f32 %v462, 0.0
        %v509 = vmax.f32 %v467, 0.0
        %v510 = vmax.f32 %v472, 0.0
        %v511 = vmax.f32 %v477, 0.0
        %v512 = vmax.f32 %v482, 0.0
        %v513 = vmax.f32 %v487, 0.0
        %v514 = vmax.f32 %v492, 0.0
        %v515 = vmax.f32 %v497, 0.0
        %v516 = vld [vmem:[%s3] sm:$0xff]
        %v517 = vld [vmem:[%s3 + $0x8] sm:$0xff]
        %v518 = vld [vmem:[%s4] sm:$0x1]
        %v520 = vlaneseq
        %v521 = vshrl.u32 %v520, 7
        %v522 = vsub.s32 0, %v521
        %v523 = vrot.slane %v518, %v522
        %vm525 = vcmask 130048
        %v527 = vsel %vm525, %v500, 0
        %v530 = vsel %vm525, %v501, 0
        %v533 = vsel %vm525, %v502, 0
        %v536 = vsel %vm525, %v503, 0
        %v539 = vsel %vm525, %v504, 0
        %v542 = vsel %vm525, %v505, 0
        %v545 = vsel %vm525, %v506, 0
        %v548 = vsel %vm525, %v507, 0
        %v551 = vsel %vm525, %v508, 0
        %v554 = vsel %vm525, %v509, 0
        %v557 = vsel %vm525, %v510, 0
        %v560 = vsel %vm525, %v511, 0
        %v563 = vsel %vm525, %v512, 0
        %v566 = vsel %vm525, %v513, 0
        %v569 = vsel %vm525, %v514, 0
        %v572 = vsel %vm525, %v515, 0
        %574 = vmatprep.subr.mxu0 0.0
        %575 = vmatpush1.msra.mxu0 0.0
        %576 = vmatprep.subr.mxu0 0.0
        %577 = vmatpush1.msra.mxu0 0.0
        %578 = vmatprep.subr.mxu0 0.0
        %579 = vmatpush1.msra.mxu0 0.0
        %580 = vmatprep.subr.mxu0 0.0
        %581 = vmatpush1.msra.mxu0 0.0
        %582 = vmatprep.subr.mxu0 0.0
        %583 = vmatpush1.msra.mxu0 0.0
        %584 = vmatprep.subr.mxu0 0.0
        %585 = vmatpush1.msra.mxu0 0.0
        %586 = vmatprep.subr.mxu0 0.0
        %587 = vmatpush1.msra.mxu0 0.0
        %588 = vmatprep.subr.mxu0 0.0
        %589 = vmatpush1.msra.mxu0 0.0
        %590 = vmatprep.subr.mxu0 0.0
        %591 = vmatpush1.msra.mxu0 0.0
        %592 = vmatprep.subr.mxu0 0.0
        %593 = vmatpush1.msra.mxu0 0.0
        %594 = vmatprep.subr.mxu0 0.0
        %595 = vmatpush1.msra.mxu0 0.0
        %596 = vmatprep.subr.mxu0 0.0
        %597 = vmatpush1.msra.mxu0 0.0
        %598 = vmatprep.subr.mxu0 0.0
        %599 = vmatpush1.msra.mxu0 0.0
        %600 = vmatprep.subr.mxu0 0.0
        %601 = vmatpush1.msra.mxu0 0.0
        %602 = vmatprep.subr.mxu0 0.0
        %603 = vmatpush1.msra.mxu0 %v517
        %604 = vmatprep.subr.mxu0 0.0
        %605 = vmatpush1.msra.mxu0 %v516
        %606 = vmatprep.subr.mxu0 0.0
        %607 = vmatpush2.msra.mxu0 0.0
        %608 = vmatprep.subr.mxu0 0.0
        %609 = vmatpush2.msra.mxu0 0.0
        %610 = vmatprep.subr.mxu0 0.0
        %611 = vmatpush2.msra.mxu0 0.0
        %612 = vmatprep.subr.mxu0 0.0
        %613 = vmatpush2.msra.mxu0 0.0
        %614 = vmatprep.subr.mxu0 0.0
        %615 = vmatpush2.msra.mxu0 0.0
        %616 = vmatprep.subr.mxu0 0.0
        %617 = vmatpush2.msra.mxu0 0.0
        %618 = vmatprep.subr.mxu0 0.0
        %619 = vmatpush2.msra.mxu0 0.0
        %620 = vmatprep.subr.mxu0 0.0
        %621 = vmatpush2.msra.mxu0 0.0
        %622 = vmatprep.subr.mxu0 0.0
        %623 = vmatpush2.msra.mxu0 0.0
        %624 = vmatprep.subr.mxu0 0.0
        %625 = vmatpush2.msra.mxu0 0.0
        %626 = vmatprep.subr.mxu0 0.0
        %627 = vmatpush2.msra.mxu0 0.0
        %628 = vmatprep.subr.mxu0 0.0
        %629 = vmatpush2.msra.mxu0 0.0
        %630 = vmatprep.subr.mxu0 0.0
        %631 = vmatpush2.msra.mxu0 0.0
        %632 = vmatprep.subr.mxu0 0.0
        %633 = vmatpush2.msra.mxu0 0.0
        %634 = vmatprep.subr.mxu0 0.0
        %635 = vmatpush2.msra.mxu0 0.0
        %636 = vmatprep.subr.mxu0 0.0
        %637 = vmatpush2.msra.mxu0 0.0
        %638 = vmatprep.mubr.f32.mxu0 0.0
        %639 = vmatmul.mubr.f32.gmra.mxu0 %v527
        %v640 = vpop.f32.mrf.mxu0
        %v641 = vadd.f32 %v523, %v640
        %v642 = vpop.f32.mrf.mxu0
        %643 = vmatprep.mubr.f32.mxu0 0.0
        %644 = vmatmul.mubr.f32.gmra.mxu0 %v530
        %v645 = vpop.f32.mrf.mxu0
        %v646 = vadd.f32 %v523, %v645
        %v647 = vpop.f32.mrf.mxu0
        %648 = vmatprep.mubr.f32.mxu0 0.0
        %649 = vmatmul.mubr.f32.gmra.mxu0 %v533
        %v650 = vpop.f32.mrf.mxu0
        %v651 = vadd.f32 %v523, %v650
        %v652 = vpop.f32.mrf.mxu0
        %653 = vmatprep.mubr.f32.mxu0 0.0
        %654 = vmatmul.mubr.f32.gmra.mxu0 %v536
        %v655 = vpop.f32.mrf.mxu0
        %v656 = vadd.f32 %v523, %v655
        %v657 = vpop.f32.mrf.mxu0
        %658 = vmatprep.mubr.f32.mxu0 0.0
        %659 = vmatmul.mubr.f32.gmra.mxu0 %v539
        %v660 = vpop.f32.mrf.mxu0
        %v661 = vadd.f32 %v523, %v660
        %v662 = vpop.f32.mrf.mxu0
        %663 = vmatprep.mubr.f32.mxu0 0.0
        %664 = vmatmul.mubr.f32.gmra.mxu0 %v542
        %v665 = vpop.f32.mrf.mxu0
        %v666 = vadd.f32 %v523, %v665
        %v667 = vpop.f32.mrf.mxu0
        %668 = vmatprep.mubr.f32.mxu0 0.0
        %669 = vmatmul.mubr.f32.gmra.mxu0 %v545
        %v670 = vpop.f32.mrf.mxu0
        %v671 = vadd.f32 %v523, %v670
        %v672 = vpop.f32.mrf.mxu0
        %673 = vmatprep.mubr.f32.mxu0 0.0
        %674 = vmatmul.mubr.f32.gmra.mxu0 %v548
        %v675 = vpop.f32.mrf.mxu0
        %v676 = vadd.f32 %v523, %v675
        %v677 = vpop.f32.mrf.mxu0
        %678 = vmatprep.mubr.f32.mxu0 0.0
        %679 = vmatmul.mubr.f32.gmra.mxu0 %v551
        %v680 = vpop.f32.mrf.mxu0
        %v681 = vadd.f32 %v523, %v680
        %v682 = vpop.f32.mrf.mxu0
        %683 = vmatprep.mubr.f32.mxu0 0.0
        %684 = vmatmul.mubr.f32.gmra.mxu0 %v554
        %v685 = vpop.f32.mrf.mxu0
        %v686 = vadd.f32 %v523, %v685
        %v687 = vpop.f32.mrf.mxu0
        %688 = vmatprep.mubr.f32.mxu0 0.0
        %689 = vmatmul.mubr.f32.gmra.mxu0 %v557
        %v690 = vpop.f32.mrf.mxu0
        %v691 = vadd.f32 %v523, %v690
        %v692 = vpop.f32.mrf.mxu0
        %693 = vmatprep.mubr.f32.mxu0 0.0
        %694 = vmatmul.mubr.f32.gmra.mxu0 %v560
        %v695 = vpop.f32.mrf.mxu0
        %v696 = vadd.f32 %v523, %v695
        %v697 = vpop.f32.mrf.mxu0
        %698 = vmatprep.mubr.f32.mxu0 0.0
        %699 = vmatmul.mubr.f32.gmra.mxu0 %v563
        %v700 = vpop.f32.mrf.mxu0
        %v701 = vadd.f32 %v523, %v700
        %v702 = vpop.f32.mrf.mxu0
        %703 = vmatprep.mubr.f32.mxu0 0.0
        %704 = vmatmul.mubr.f32.gmra.mxu0 %v566
        %v705 = vpop.f32.mrf.mxu0
        %v706 = vadd.f32 %v523, %v705
        %v707 = vpop.f32.mrf.mxu0
        %708 = vmatprep.mubr.f32.mxu0 0.0
        %709 = vmatmul.mubr.f32.gmra.mxu0 %v569
        %v710 = vpop.f32.mrf.mxu0
        %v711 = vadd.f32 %v523, %v710
        %v712 = vpop.f32.mrf.mxu0
        %713 = vmatprep.mubr.f32.mxu0 0.0
        %714 = vmatmul.mubr.f32.gmra.mxu0 %v572
        %v715 = vpop.f32.mrf.mxu0
        %v716 = vadd.f32 %v523, %v715
        %v717 = vpop.f32.mrf.mxu0
        %718 = vdwg.mxu0
        %v719 = vmax.f32 %v641, 0.0
        %v720 = vmax.f32 %v646, 0.0
        %v721 = vmax.f32 %v651, 0.0
        %v722 = vmax.f32 %v656, 0.0
        %v723 = vmax.f32 %v661, 0.0
        %v724 = vmax.f32 %v666, 0.0
        %v725 = vmax.f32 %v671, 0.0
        %v726 = vmax.f32 %v676, 0.0
        %v727 = vmax.f32 %v681, 0.0
        %v728 = vmax.f32 %v686, 0.0
        %v729 = vmax.f32 %v691, 0.0
        %v730 = vmax.f32 %v696, 0.0
        %v731 = vmax.f32 %v701, 0.0
        %v732 = vmax.f32 %v706, 0.0
        %v733 = vmax.f32 %v711, 0.0
        %v734 = vmax.f32 %v716, 0.0
        %v735 = vld [vmem:[%s5] sm:$0xf]
        %v736 = vld [vmem:[%s6] sm:$0x3]
        %738 = vset.pattern.permute.xlu0 0
        %739 = vperm.xlu0 %738, %v736
        %v740 = vpop.permute.xlu0 %739
        %742 = vxpose.xlu0.b32.start [1/16] %v735, 128
        %743 = vxpose.xlu0.b32.cont [2/16] 0.0, 128
        %744 = vxpose.xlu0.b32.cont [3/16] 0.0, 128
        %745 = vxpose.xlu0.b32.cont [4/16] 0.0, 128
        %746 = vxpose.xlu0.b32.cont [5/16] 0.0, 128
        %747 = vxpose.xlu0.b32.cont [6/16] 0.0, 128
        %748 = vxpose.xlu0.b32.cont [7/16] 0.0, 128
        %749 = vxpose.xlu0.b32.cont [8/16] 0.0, 128
        %750 = vxpose.xlu0.b32.cont [9/16] 0.0, 128
        %751 = vxpose.xlu0.b32.cont [10/16] 0.0, 128
        %752 = vxpose.xlu0.b32.cont [11/16] 0.0, 128
        %753 = vxpose.xlu0.b32.cont [12/16] 0.0, 128
        %754 = vxpose.xlu0.b32.cont [13/16] 0.0, 128
        %755 = vxpose.xlu0.b32.cont [14/16] 0.0, 128
        %756 = vxpose.xlu0.b32.cont [15/16] 0.0, 128
        %757 = vxpose.xlu0.b32.end [16/16] 0.0, 128
        %v758 = vpop.trf.xlu0
        %v759 = vpop.trf.xlu0
        %v760 = vpop.trf.xlu0
        %v761 = vpop.trf.xlu0
        %v762 = vpop.trf.xlu0
        %v763 = vpop.trf.xlu0
        %v764 = vpop.trf.xlu0
        %v765 = vpop.trf.xlu0
        %v766 = vpop.trf.xlu0
        %v767 = vpop.trf.xlu0
        %v768 = vpop.trf.xlu0
        %v769 = vpop.trf.xlu0
        %v770 = vpop.trf.xlu0
        %v771 = vpop.trf.xlu0
        %v772 = vpop.trf.xlu0
        %v773 = vpop.trf.xlu0
        %vm774 = vcmask 31744
        %v776 = vsel %vm774, %v758, 0
        %v779 = vsel %vm774, %v719, 0
        %v782 = vsel %vm774, %v720, 0
        %v785 = vsel %vm774, %v721, 0
        %v788 = vsel %vm774, %v722, 0
        %v791 = vsel %vm774, %v723, 0
        %v794 = vsel %vm774, %v724, 0
        %v797 = vsel %vm774, %v725, 0
        %v800 = vsel %vm774, %v726, 0
        %v803 = vsel %vm774, %v727, 0
        %v806 = vsel %vm774, %v728, 0
        %v809 = vsel %vm774, %v729, 0
        %v812 = vsel %vm774, %v730, 0
        %v815 = vsel %vm774, %v731, 0
        %v818 = vsel %vm774, %v732, 0
        %v821 = vsel %vm774, %v733, 0
        %v824 = vsel %vm774, %v734, 0
        %826 = vmatprep.subr.mxu0 0.0
        %827 = vmatpush1.xpose.msra.mxu0 %v824
        %828 = vmatprep.subr.mxu0 0.0
        %829 = vmatpush1.xpose.msra.mxu0 %v821
        %830 = vmatprep.subr.mxu0 0.0
        %831 = vmatpush1.xpose.msra.mxu0 %v818
        %832 = vmatprep.subr.mxu0 0.0
        %833 = vmatpush1.xpose.msra.mxu0 %v815
        %834 = vmatprep.subr.mxu0 0.0
        %835 = vmatpush1.xpose.msra.mxu0 %v812
        %836 = vmatprep.subr.mxu0 0.0
        %837 = vmatpush1.xpose.msra.mxu0 %v809
        %838 = vmatprep.subr.mxu0 0.0
        %839 = vmatpush1.xpose.msra.mxu0 %v806
        %840 = vmatprep.subr.mxu0 0.0
        %841 = vmatpush1.xpose.msra.mxu0 %v803
        %842 = vmatprep.subr.mxu0 0.0
        %843 = vmatpush1.xpose.msra.mxu0 %v800
        %844 = vmatprep.subr.mxu0 0.0
        %845 = vmatpush1.xpose.msra.mxu0 %v797
        %846 = vmatprep.subr.mxu0 0.0
        %847 = vmatpush1.xpose.msra.mxu0 %v794
        %848 = vmatprep.subr.mxu0 0.0
        %849 = vmatpush1.xpose.msra.mxu0 %v791
        %850 = vmatprep.subr.mxu0 0.0
        %851 = vmatpush1.xpose.msra.mxu0 %v788
        %852 = vmatprep.subr.mxu0 0.0
        %853 = vmatpush1.xpose.msra.mxu0 %v785
        %854 = vmatprep.subr.mxu0 0.0
        %855 = vmatpush1.xpose.msra.mxu0 %v782
        %856 = vmatprep.subr.mxu0 0.0
        %857 = vmatpush1.xpose.msra.mxu0 %v779
        %858 = vmatprep.subr.mxu0 0.0
        %859 = vmatpush2.xpose.msra.mxu0 0.0
        %860 = vmatprep.subr.mxu0 0.0
        %861 = vmatpush2.xpose.msra.mxu0 0.0
        %862 = vmatprep.subr.mxu0 0.0
        %863 = vmatpush2.xpose.msra.mxu0 0.0
        %864 = vmatprep.subr.mxu0 0.0
        %865 = vmatpush2.xpose.msra.mxu0 0.0
        %866 = vmatprep.subr.mxu0 0.0
        %867 = vmatpush2.xpose.msra.mxu0 0.0
        %868 = vmatprep.subr.mxu0 0.0
        %869 = vmatpush2.xpose.msra.mxu0 0.0
        %870 = vmatprep.subr.mxu0 0.0
        %871 = vmatpush2.xpose.msra.mxu0 0.0
        %872 = vmatprep.subr.mxu0 0.0
        %873 = vmatpush2.xpose.msra.mxu0 0.0
        %874 = vmatprep.subr.mxu0 0.0
        %875 = vmatpush2.xpose.msra.mxu0 0.0
        %876 = vmatprep.subr.mxu0 0.0
        %877 = vmatpush2.xpose.msra.mxu0 0.0
        %878 = vmatprep.subr.mxu0 0.0
        %879 = vmatpush2.xpose.msra.mxu0 0.0
        %880 = vmatprep.subr.mxu0 0.0
        %881 = vmatpush2.xpose.msra.mxu0 0.0
        %882 = vmatprep.subr.mxu0 0.0
        %883 = vmatpush2.xpose.msra.mxu0 0.0
        %884 = vmatprep.subr.mxu0 0.0
        %885 = vmatpush2.xpose.msra.mxu0 0.0
        %886 = vmatprep.subr.mxu0 0.0
        %887 = vmatpush2.xpose.msra.mxu0 0.0
        %888 = vmatprep.subr.mxu0 0.0
        %889 = vmatpush2.xpose.msra.mxu0 0.0
        %890 = vmatprep.mubr.f32.mxu0 0.0
        %891 = vmatmul.mubr.f32.gmra.mxu0 %v776
        %v892 = vpop.f32.mrf.mxu0
        %v893 = vadd.f32 %v740, %v892
        %v894 = vpop.f32.mrf.mxu0
        %895 = vdwg.mxu0
        %896 = vst [vmem:[%s272] sm:$0x3] %v893
        %s897 = sand.u32 %s181, 1
        %s898 = scalar_lea.sflag [#allocation3], %s897
        %s899 = sand.u32 %s181, 1
        %s900 = smul.addr %s899, 2
        %s901 = scalar_lea.vmem [#allocation2], %s900
        // Predicated region
        $region49: #{tpu_custom_call.1} parent=47 // pred_check
          %p902 = pneg %p191
        $region50: #{tpu_custom_call.1} parent=47 // pred_check_branch
          %904 = sbr.rel (%p902) target = $region52
        $region51: #{tpu_custom_call.1} parent=47 // pred_region
          %s906 = ssub.s32 32, 32
          %907 = vsyncadd %s898, %s906
          %s908 = smul.addr %s21, 32
          %s909 = scalar_lea.hbm %s7, %s908
          %s911 = sshll.u32 %s901, 4
          %s912 = int_to_ptr.vmem [resolvable:$true] %s911
          %914 = dma.vmem_to_hbm [thread:$0]  %s912, 32, %s909, %s898
        $region52: #{tpu_custom_call.1} parent=47 // pred_fallthru
          _
      $region48: #{tpu_custom_call.1} parent=5 // pred_fallthru
        _
      %p915 = scmp.le.s32.totalorder 2, %s16
      // Predicated region
      $region53: #{tpu_custom_call.1} parent=5 // pred_check
        %p916 = pneg %p915
      $region54: #{tpu_custom_call.1} parent=5 // pred_check_branch
        %918 = sbr.rel (%p916) target = $region56
      $region55: #{tpu_custom_call.1} parent=5 // pred_region
        %s919 = ssub.s32 %s16, 2
        // Predicated region
        $region57: #{tpu_custom_call.1} parent=55 // pred_check
          %p920 = pneg %p197
        $region58: #{tpu_custom_call.1} parent=55 // pred_check_branch
          %922 = sbr.rel (%p920) target = $region60
        $region59: #{tpu_custom_call.1} parent=55 // pred_region
          %s923 = sand.u32 %s182, 1
          %s924 = scalar_lea.sflag [#allocation3], %s923
          %s925 = sand.u32 %s182, 1
          %s926 = smul.addr %s925, 2
          %s927 = scalar_lea.vmem [#allocation2], %s926
          %928 = dma.done %s924, 32
        $region60: #{tpu_custom_call.1} parent=55 // pred_fallthru
          _
      $region56: #{tpu_custom_call.1} parent=5 // pred_fallthru
        _
    $region6: #{tpu_custom_call.1} parent=1 // loop_footer
      %s20 = sadd.s32 1, %s16
    $region7: #{tpu_custom_call.1} parent=1 // loop_footer_branch
      %15 = sbr.rel target = $region3
    $region8: #{tpu_custom_call.1} parent=1 // loop_exit
      _
    %929 = vsyncpa [#allocation3], 1
    %s930 = scalar_lea.sflag [#allocation3], 1
    %931 = vsyncpa %s930, 1

</llo_original>
